<compile_context>
chip_gen: v7x
topology: tpu7x:2x2x1
jax: 0.10.0
libtpu: 0.0.40
codegen_flags: <defaults>
</compile_context>

<pallas_src>
import jax
import jax.numpy as jnp
import numpy as np
from jax.experimental import pallas as pl
from jax.experimental.pallas import tpu as pltpu

L1_LAMBDA = 5e-05
_EPS_NORM = 1e-12  # F.normalize clamps the L2 norm at 1e-12


def _pair_sa_kernel(true_ref, pred_ref, neg_true_ref, neg_pred_ref, out_ref):
    """Per-row stats for one (TB, D) tile.

    out_ref columns: [cos_sim_pos, cos_sim_neg, l1_rowsum_pos, l1_rowsum_neg]
    """

    def _cos_sim(t, p):
        # spectral_angle() up to (and including) the clamp of the cosine.
        # Instead of normalizing the full (TB, D) vectors (two broadcast
        # divides over D per pair), reduce to per-row sums and rescale the
        # dot product.  Mathematically identical: max(sqrt(ssq), 1e-12)
        # mirrors F.normalize's clamp of the L2 norm at 1e-12.
        mask = t >= 0.0
        p2 = jnp.where(mask, p, 0.0)
        t2 = jnp.where(mask, t, 0.0)
        dot = jnp.sum(p2 * t2, axis=-1, keepdims=True)
        nrm_p = jnp.maximum(
            jnp.sqrt(jnp.sum(p2 * p2, axis=-1, keepdims=True)), _EPS_NORM)
        nrm_t = jnp.maximum(
            jnp.sqrt(jnp.sum(t2 * t2, axis=-1, keepdims=True)), _EPS_NORM)
        return jnp.clip(dot / (nrm_p * nrm_t), -1.0, 1.0)

    t = true_ref[...].astype(jnp.float32)
    p = pred_ref[...].astype(jnp.float32)
    nt = neg_true_ref[...].astype(jnp.float32)
    npd = neg_pred_ref[...].astype(jnp.float32)

    re_pos = _cos_sim(t, p)                                    # (TB, 1)
    re_neg = _cos_sim(nt, npd)                                 # (TB, 1)
    l1_pos = jnp.sum(jnp.abs(p), axis=-1, keepdims=True)       # (TB, 1)
    l1_neg = jnp.sum(jnp.abs(npd), axis=-1, keepdims=True)     # (TB, 1)

    out_ref[...] = jnp.concatenate([re_pos, re_neg, l1_pos, l1_neg], axis=-1)


def _choose_row_tile(B, D, itemsize):
    """Pick a row tile TB (multiple of 8).

    VMEM budget: 4 inputs x 2 pipeline buffers x TB x D x itemsize <= ~8 MiB,
    which keeps comfortable headroom under every generation's scoped-VMEM
    default (16 MiB v5e, 32 MiB v6e/v7x; v7x physical VMEM is only 64 MiB/TC).
    Also keep >= 2 grid steps when the batch allows so the 'parallel' grid
    axis can be sharded across v7x's two TensorCores.
    """
    budget = 8 * 1024 * 1024
    tb = budget // (8 * D * itemsize)
    tb = max(8, (tb // 8) * 8)
    tb = min(tb, 2048)
    b_pad8 = ((B + 7) // 8) * 8
    if b_pad8 >= 16 and tb * 2 > b_pad8:
        tb = max(8, ((b_pad8 // 2) // 8) * 8)
    return min(tb, b_pad8)


def finetune_pair_sa_loss(true, pred, neg_true, neg_pred, l1_lambda=L1_LAMBDA):
    """Returns (loss, base, l1_v) exactly as FinetunePairSALoss.forward."""
    B, D = true.shape
    itemsize = max(jnp.dtype(x.dtype).itemsize
                   for x in (true, pred, neg_true, neg_pred))
    TB = _choose_row_tile(B, D, itemsize)
    B_pad = ((B + TB - 1) // TB) * TB

    def _pad(x):
        if B_pad == B:
            return x
        return jnp.pad(x, ((0, B_pad - B), (0, 0)))

    # NOTE: no wrapper-side astype — the kernel upcasts on load, so narrow
    # dtypes stay narrow in HBM (this kernel is HBM-bandwidth bound).
    stats = pl.pallas_call(
        _pair_sa_kernel,
        out_shape=jax.ShapeDtypeStruct((B_pad, 4), jnp.float32),
        grid_spec=pl.GridSpec(
            grid=(B_pad // TB,),
            in_specs=[pl.BlockSpec((TB, D), lambda i: (i, 0)) for _ in range(4)],
            out_specs=pl.BlockSpec((TB, 4), lambda i: (i, 0)),
        ),
        compiler_params=pltpu.CompilerParams(
            dimension_semantics=("parallel",)),
    )(_pad(true), _pad(pred), _pad(neg_true), _pad(neg_pred))

    stats = stats[:B]  # drop padded rows before any reduction
    re_pos = stats[:, 0]
    re_neg = stats[:, 1]
    l1_pos = stats[:, 2]
    l1_neg = stats[:, 3]

    # TODO(synk): arccos kept in the JAX wrapper (inverse-trig lowering is not
    # guaranteed by Mosaic); it is a trivial (B,)-sized elementwise op.
    sas = 1.0 - (2.0 / jnp.pi) * jnp.arccos(re_pos)
    sas_neg = 1.0 - (2.0 / jnp.pi) * jnp.arccos(re_neg)

    base = 1.0 - (sas - sas_neg)
    base = jnp.where(base < 0.0, 0.0, base)
    base = jnp.mean(base)

    l1_v = jnp.mean(l1_pos) + jnp.mean(l1_neg)
    loss = base + l1_lambda * l1_v
    return loss, base, l1_v


def _reference(true, pred, neg_true, neg_pred, l1_lambda=L1_LAMBDA):
    """Pure-JAX reference mirroring the PyTorch code."""
    def spectral_angle(t, p):
        mask = (t >= 0.0).astype(jnp.float32)
        p2 = p * mask
        t2 = t * mask
        p2 = p2 / jnp.maximum(jnp.linalg.norm(p2, axis=-1, keepdims=True), _EPS_NORM)
        t2 = t2 / jnp.maximum(jnp.linalg.norm(t2, axis=-1, keepdims=True), _EPS_NORM)
        re = jnp.clip(jnp.sum(p2 * t2, axis=-1), -1.0, 1.0)
        return 1.0 - (2.0 / jnp.pi) * jnp.arccos(re)

    l1_v = jnp.abs(pred).sum(1).mean() + jnp.abs(neg_pred).sum(1).mean()
    sas = spectral_angle(true, pred)
    sas_neg = spectral_angle(neg_true, neg_pred)
    base = jnp.maximum(1.0 - (sas - sas_neg), 0.0).mean()
    return base + l1_lambda * l1_v, base, l1_v


if __name__ == "__main__":
    def _make_inputs(key, B, D):
        k1, k2, k3, k4, k5, k6 = jax.random.split(key, 6)
        # "true" intensity vectors use -1 to mark invalid positions (Prosit style).
        true = jax.random.uniform(k1, (B, D), dtype=jnp.float32)
        true = jnp.where(jax.random.bernoulli(k2, 0.3, (B, D)), -1.0, true)
        pred = jax.random.normal(k3, (B, D), dtype=jnp.float32)
        neg_true = jax.random.uniform(k4, (B, D), dtype=jnp.float32)
        neg_true = jnp.where(jax.random.bernoulli(k5, 0.3, (B, D)), -1.0, neg_true)
        neg_pred = jax.random.normal(k6, (B, D), dtype=jnp.float32)
        return true, pred, neg_true, neg_pred

    key = jax.random.PRNGKey(0)
    k_a, k_b = jax.random.split(key)
    jitted = jax.jit(finetune_pair_sa_loss)

    # (8, 128): aligned batch.  (13, 96): ragged batch exercising the padding
    # path and a multi-step grid.
    for k, (B, D) in ((k_a, (8, 128)), (k_b, (13, 96))):
        inputs = _make_inputs(k, B, D)
        loss, base, l1_v = jitted(*inputs)
        jax.block_until_ready(loss)

        ref_loss, ref_base, ref_l1 = _reference(*inputs)
        np.testing.assert_allclose(np.array(loss), np.array(ref_loss),
                                   rtol=1e-5, atol=1e-5)
        np.testing.assert_allclose(np.array(base), np.array(ref_base),
                                   rtol=1e-5, atol=1e-5)
        np.testing.assert_allclose(np.array(l1_v), np.array(ref_l1),
                                   rtol=1e-5, atol=1e-4)

    print("KERNEL_OK")
</pallas_src>

<mosaic_0001>
module attributes {stable_mosaic.version = 11 : i64} {
  func.func @_pair_sa_kernel(%arg0: i32, %arg1: memref<8x128xf32, #tpu.memory_space<vmem>>, %arg2: memref<8x128xf32, #tpu.memory_space<vmem>>, %arg3: memref<8x128xf32, #tpu.memory_space<vmem>>, %arg4: memref<8x128xf32, #tpu.memory_space<vmem>>, %arg5: memref<8x4xf32, #tpu.memory_space<vmem>>) attributes {dimension_semantics = [#tpu.dimension_semantics<parallel>], iteration_bounds = array<i64: 1>, scalar_prefetch = 0 : i64, scratch_operands = 0 : i64, tpu.core_type = #tpu.core_type<tc>, window_params = [{transform_indices = @transform_0, window_bounds = array<i64: 8, 128>}, {transform_indices = @transform_1, window_bounds = array<i64: 8, 128>}, {transform_indices = @transform_2, window_bounds = array<i64: 8, 128>}, {transform_indices = @transform_3, window_bounds = array<i64: 8, 128>}, {transform_indices = @transform_4, window_bounds = array<i64: 8, 4>}]} {
    %c0 = arith.constant 0 : index
    %c0_0 = arith.constant 0 : index
    %0 = vector.load %arg1[%c0, %c0_0] : memref<8x128xf32, #tpu.memory_space<vmem>>, vector<8x128xf32>
    %c0_1 = arith.constant 0 : index
    %c0_2 = arith.constant 0 : index
    %1 = vector.load %arg2[%c0_1, %c0_2] : memref<8x128xf32, #tpu.memory_space<vmem>>, vector<8x128xf32>
    %c0_3 = arith.constant 0 : index
    %c0_4 = arith.constant 0 : index
    %2 = vector.load %arg3[%c0_3, %c0_4] : memref<8x128xf32, #tpu.memory_space<vmem>>, vector<8x128xf32>
    %c0_5 = arith.constant 0 : index
    %c0_6 = arith.constant 0 : index
    %3 = vector.load %arg4[%c0_5, %c0_6] : memref<8x128xf32, #tpu.memory_space<vmem>>, vector<8x128xf32>
    %cst = arith.constant 0.000000e+00 : f32
    %4 = vector.broadcast %cst : f32 to vector<8x128xf32>
    %5 = arith.cmpf oge, %0, %4 : vector<8x128xf32>
    %cst_7 = arith.constant 0.000000e+00 : f32
    %6 = vector.broadcast %cst_7 : f32 to vector<8x128xf32>
    %7 = arith.select %5, %1, %6 : vector<8x128xi1>, vector<8x128xf32>
    %cst_8 = arith.constant 0.000000e+00 : f32
    %8 = vector.broadcast %cst_8 : f32 to vector<8x128xf32>
    %9 = arith.select %5, %0, %8 : vector<8x128xi1>, vector<8x128xf32>
    %10 = arith.mulf %7, %9 : vector<8x128xf32>
    %cst_9 = arith.constant dense<0.000000e+00> : vector<8xf32>
    %11 = vector.multi_reduction <add>, %10, %cst_9 [1] : vector<8x128xf32> to vector<8xf32>
    %12 = vector.shape_cast %11 : vector<8xf32> to vector<8x1xf32>
    %13 = arith.mulf %7, %7 : vector<8x128xf32>
    %cst_10 = arith.constant dense<0.000000e+00> : vector<8xf32>
    %14 = vector.multi_reduction <add>, %13, %cst_10 [1] : vector<8x128xf32> to vector<8xf32>
    %15 = vector.shape_cast %14 : vector<8xf32> to vector<8x1xf32>
    %16 = math.sqrt %15 : vector<8x1xf32>
    %cst_11 = arith.constant 9.99999996E-13 : f32
    %17 = vector.broadcast %cst_11 : f32 to vector<8x1xf32>
    %18 = arith.maximumf %16, %17 : vector<8x1xf32>
    %19 = arith.mulf %9, %9 : vector<8x128xf32>
    %cst_12 = arith.constant dense<0.000000e+00> : vector<8xf32>
    %20 = vector.multi_reduction <add>, %19, %cst_12 [1] : vector<8x128xf32> to vector<8xf32>
    %21 = vector.shape_cast %20 : vector<8xf32> to vector<8x1xf32>
    %22 = math.sqrt %21 : vector<8x1xf32>
    %cst_13 = arith.constant 9.99999996E-13 : f32
    %23 = vector.broadcast %cst_13 : f32 to vector<8x1xf32>
    %24 = arith.maximumf %22, %23 : vector<8x1xf32>
    %25 = arith.mulf %18, %24 : vector<8x1xf32>
    %26 = arith.divf %12, %25 : vector<8x1xf32>
    %cst_14 = arith.constant -1.000000e+00 : f32
    %cst_15 = arith.constant 1.000000e+00 : f32
    %27 = vector.broadcast %cst_14 : f32 to vector<8x1xf32>
    %28 = arith.maximumf %27, %26 : vector<8x1xf32>
    %29 = vector.broadcast %cst_15 : f32 to vector<8x1xf32>
    %30 = arith.minimumf %29, %28 : vector<8x1xf32>
    %cst_16 = arith.constant 0.000000e+00 : f32
    %31 = vector.broadcast %cst_16 : f32 to vector<8x128xf32>
    %32 = arith.cmpf oge, %2, %31 : vector<8x128xf32>
    %cst_17 = arith.constant 0.000000e+00 : f32
    %33 = vector.broadcast %cst_17 : f32 to vector<8x128xf32>
    %34 = arith.select %32, %3, %33 : vector<8x128xi1>, vector<8x128xf32>
    %cst_18 = arith.constant 0.000000e+00 : f32
    %35 = vector.broadcast %cst_18 : f32 to vector<8x128xf32>
    %36 = arith.select %32, %2, %35 : vector<8x128xi1>, vector<8x128xf32>
    %37 = arith.mulf %34, %36 : vector<8x128xf32>
    %cst_19 = arith.constant dense<0.000000e+00> : vector<8xf32>
    %38 = vector.multi_reduction <add>, %37, %cst_19 [1] : vector<8x128xf32> to vector<8xf32>
    %39 = vector.shape_cast %38 : vector<8xf32> to vector<8x1xf32>
    %40 = arith.mulf %34, %34 : vector<8x128xf32>
    %cst_20 = arith.constant dense<0.000000e+00> : vector<8xf32>
    %41 = vector.multi_reduction <add>, %40, %cst_20 [1] : vector<8x128xf32> to vector<8xf32>
    %42 = vector.shape_cast %41 : vector<8xf32> to vector<8x1xf32>
    %43 = math.sqrt %42 : vector<8x1xf32>
    %cst_21 = arith.constant 9.99999996E-13 : f32
    %44 = vector.broadcast %cst_21 : f32 to vector<8x1xf32>
    %45 = arith.maximumf %43, %44 : vector<8x1xf32>
    %46 = arith.mulf %36, %36 : vector<8x128xf32>
    %cst_22 = arith.constant dense<0.000000e+00> : vector<8xf32>
    %47 = vector.multi_reduction <add>, %46, %cst_22 [1] : vector<8x128xf32> to vector<8xf32>
    %48 = vector.shape_cast %47 : vector<8xf32> to vector<8x1xf32>
    %49 = math.sqrt %48 : vector<8x1xf32>
    %cst_23 = arith.constant 9.99999996E-13 : f32
    %50 = vector.broadcast %cst_23 : f32 to vector<8x1xf32>
    %51 = arith.maximumf %49, %50 : vector<8x1xf32>
    %52 = arith.mulf %45, %51 : vector<8x1xf32>
    %53 = arith.divf %39, %52 : vector<8x1xf32>
    %cst_24 = arith.constant -1.000000e+00 : f32
    %cst_25 = arith.constant 1.000000e+00 : f32
    %54 = vector.broadcast %cst_24 : f32 to vector<8x1xf32>
    %55 = arith.maximumf %54, %53 : vector<8x1xf32>
    %56 = vector.broadcast %cst_25 : f32 to vector<8x1xf32>
    %57 = arith.minimumf %56, %55 : vector<8x1xf32>
    %58 = math.absf %1 : vector<8x128xf32>
    %cst_26 = arith.constant dense<0.000000e+00> : vector<8xf32>
    %59 = vector.multi_reduction <add>, %58, %cst_26 [1] : vector<8x128xf32> to vector<8xf32>
    %60 = vector.shape_cast %59 : vector<8xf32> to vector<8x1xf32>
    %61 = math.absf %3 : vector<8x128xf32>
    %cst_27 = arith.constant dense<0.000000e+00> : vector<8xf32>
    %62 = vector.multi_reduction <add>, %61, %cst_27 [1] : vector<8x128xf32> to vector<8xf32>
    %63 = vector.shape_cast %62 : vector<8xf32> to vector<8x1xf32>
    %64 = tpu.concatenate %30, %57, %60, %63 in 1 : vector<8x1xf32>, vector<8x1xf32>, vector<8x1xf32>, vector<8x1xf32> -> vector<8x4xf32>
    %c0_28 = arith.constant 0 : index
    %c0_29 = arith.constant 0 : index
    %65 = vector.load %arg5[%c0_28, %c0_29] : memref<8x4xf32, #tpu.memory_space<vmem>>, vector<8x4xf32>
    tpu.vector_store %arg5[%c0_28, %c0_29], %64 {strides = array<i32>} : memref<8x4xf32, #tpu.memory_space<vmem>>, vector<8x4xf32>,
    return
  }
  func.func @transform_0(%arg0: i32) -> (i32, i32) {
    %c0_i32 = arith.constant 0 : i32
    %c0_i32_0 = arith.constant 0 : i32
    return %arg0, %c0_i32 : i32, i32
  }
  func.func @transform_1(%arg0: i32) -> (i32, i32) {
    %c0_i32 = arith.constant 0 : i32
    %c0_i32_0 = arith.constant 0 : i32
    return %arg0, %c0_i32 : i32, i32
  }
  func.func @transform_2(%arg0: i32) -> (i32, i32) {
    %c0_i32 = arith.constant 0 : i32
    %c0_i32_0 = arith.constant 0 : i32
    return %arg0, %c0_i32 : i32, i32
  }
  func.func @transform_3(%arg0: i32) -> (i32, i32) {
    %c0_i32 = arith.constant 0 : i32
    %c0_i32_0 = arith.constant 0 : i32
    return %arg0, %c0_i32 : i32, i32
  }
  func.func @transform_4(%arg0: i32) -> (i32, i32) {
    %c0_i32 = arith.constant 0 : i32
    %c0_i32_0 = arith.constant 0 : i32
    return %arg0, %c0_i32 : i32, i32
  }
}

</mosaic_0001>

<llo_original>
// kernel: finetune_pair_sa_loss.1
$region0: #{finetune_pair_sa_loss.1}
  #allocation0 [shape = 'u32[]', space=smem, size = 0x4, offset = 0x4, fixed_abs, tag = 'smem constant byte address 0x4 - core index']
  #allocation1 [shape = 'u32[144,128]{1,0:T(1,128)}', space=vmem, size = 0x12000, scoped, tag = 'internal scratch']
  %s0 = inlined_call_operand.hbm [shape: f32[8,128], index: 0, kind: input, shape index: {}]
  %s1 = inlined_call_operand.hbm [shape: f32[8,128], index: 1, kind: input, shape index: {}]
  %s2 = inlined_call_operand.hbm [shape: f32[8,128], index: 2, kind: input, shape index: {}]
  %s3 = inlined_call_operand.vmem [shape: f32[8,128], index: 3, kind: input, shape index: {}]
  %s4 = inlined_call_operand.vmem [shape: f32[8,4], index: 4, kind: output, shape index: {}]
  %s5 = sld [smem:[#allocation0]]
  $region38: #{finetune_pair_sa_loss.1} parent=0
    _
  %s7 = ssub.s32 1, %s5
  %s8 = scalar_select 0, %s7, %s5
  $region1: #{finetune_pair_sa_loss.1} parent=0
    #allocation2 [shape = 'u8[4096]{0}', space=vmem, size = 0x1000, scoped, tag = 'input window, operand 0, single buffered']
    #allocation3 [shape = 's32[1]{0}', space=sflag, size = 0x4, scoped, tag = 'scoped memory for finetune_pair_sa_loss.1']
    #allocation4 [shape = 'u8[4096]{0}', space=vmem, size = 0x1000, scoped, tag = 'input window, operand 1, single buffered']
    #allocation5 [shape = 's32[1]{0}', space=sflag, size = 0x4, scoped, tag = 'scoped memory for finetune_pair_sa_loss.1']
    #allocation6 [shape = 'u8[4096]{0}', space=vmem, size = 0x1000, scoped, tag = 'input window, operand 2, single buffered']
    %9 = vsyncpa [#allocation3], 0
    %10 = vsyncpa [#allocation5], 0
    // Predicated region
    $region2: #{finetune_pair_sa_loss.1} parent=1 // pred_check
      _
    $region3: #{finetune_pair_sa_loss.1} parent=1 // pred_check_branch
      %12 = sbr.rel (0) target = $region5
    $region4: #{finetune_pair_sa_loss.1} parent=1 // pred_region
      %s14 = ssub.s32 128, 128
      %15 = vsyncadd [#allocation3], %s14
      %s17 = sshll.u32 [#allocation2], 4
      %s18 = int_to_ptr.vmem [resolvable:$true] %s17
      %20 = dma.hbm_to_vmem [thread:$0]  %s0, 128, %s18, [#allocation3]
    $region5: #{finetune_pair_sa_loss.1} parent=1 // pred_fallthru
      _
    // Predicated region
    $region6: #{finetune_pair_sa_loss.1} parent=1 // pred_check
      _
    $region7: #{finetune_pair_sa_loss.1} parent=1 // pred_check_branch
      %22 = sbr.rel (0) target = $region9
    $region8: #{finetune_pair_sa_loss.1} parent=1 // pred_region
      %s24 = ssub.s32 128, 128
      %25 = vsyncadd [#allocation5], %s24
      %s27 = sshll.u32 [#allocation4], 4
      %s28 = int_to_ptr.vmem [resolvable:$true] %s27
      %30 = dma.hbm_to_vmem [thread:$0]  %s1, 128, %s28, [#allocation5]
    $region9: #{finetune_pair_sa_loss.1} parent=1 // pred_fallthru
      _
    // Predicated region
    $region10: #{finetune_pair_sa_loss.1} parent=1 // pred_check
      _
    $region11: #{finetune_pair_sa_loss.1} parent=1 // pred_check_branch
      %32 = sbr.rel (0) target = $region13
    $region12: #{finetune_pair_sa_loss.1} parent=1 // pred_region
      %s34 = ssub.s32 128, 128
      %35 = vsyncadd [#allocation5], %s34
      %s37 = sshll.u32 [#allocation6], 4
      %s38 = int_to_ptr.vmem [resolvable:$true] %s37
      %40 = dma.hbm_to_vmem [thread:$0]  %s2, 128, %s38, [#allocation5]
    $region13: #{finetune_pair_sa_loss.1} parent=1 // pred_fallthru
      _
    // Predicated region
    $region14: #{finetune_pair_sa_loss.1} parent=1 // pred_check
      _
    $region15: #{finetune_pair_sa_loss.1} parent=1 // pred_check_branch
      %42 = sbr.rel (0) target = $region17
    $region16: #{finetune_pair_sa_loss.1} parent=1 // pred_region
      _
    $region17: #{finetune_pair_sa_loss.1} parent=1 // pred_fallthru
      _
    // Predicated region
    $region18: #{finetune_pair_sa_loss.1} parent=1 // pred_check
      _
    $region19: #{finetune_pair_sa_loss.1} parent=1 // pred_check_branch
      %44 = sbr.rel (0) target = $region21
    $region20: #{finetune_pair_sa_loss.1} parent=1 // pred_region
      %45 = dma.done [#allocation3], 128
    $region21: #{finetune_pair_sa_loss.1} parent=1 // pred_fallthru
      _
    // Predicated region
    $region22: #{finetune_pair_sa_loss.1} parent=1 // pred_check
      _
    $region23: #{finetune_pair_sa_loss.1} parent=1 // pred_check_branch
      %47 = sbr.rel (0) target = $region25
    $region24: #{finetune_pair_sa_loss.1} parent=1 // pred_region
      %48 = dma.done [#allocation5], 128
    $region25: #{finetune_pair_sa_loss.1} parent=1 // pred_fallthru
      _
    // Predicated region
    $region26: #{finetune_pair_sa_loss.1} parent=1 // pred_check
      _
    $region27: #{finetune_pair_sa_loss.1} parent=1 // pred_check_branch
      %50 = sbr.rel (0) target = $region29
    $region28: #{finetune_pair_sa_loss.1} parent=1 // pred_region
      %51 = dma.done [#allocation5], 128
    $region29: #{finetune_pair_sa_loss.1} parent=1 // pred_fallthru
      _
    %v52 = vld [vmem:[#allocation2] sm:$0xff]
    %v53 = vld [vmem:[#allocation4] sm:$0xff]
    %v54 = vld [vmem:[#allocation6] sm:$0xff]
    %v55 = vld [vmem:[%s3] sm:$0xff]
    %vm56 = vcmp.ge.f32.partialorder %v52, 0.0
    %v57 = vsel %vm56, %v53, 0.0
    %v58 = vsel %vm56, %v52, 0.0
    %v59 = vmul.f32 %v57, %v58
    %60 = vadd.xlane.f32.xlu0 %v59
    %v61 = vpop.xlane.xlu0 %60
    %v62 = vmul.f32 %v57, %v57
    %63 = vadd.xlane.f32.xlu0 %v62
    %v64 = vpop.xlane.xlu0 %63
    %v65 = vrsqrt.pop %v64
    %v66 = vmul.f32 %v64, %v65
    %vm67 = vcmp.eq.f32.partialorder %v64, inf
    %v68 = vsel %vm67, %v64, %v66
    %vm69 = vcmp.eq.f32.partialorder %v64, 0.0
    %v70 = vand.u32 %v64, 2147483648
    %v71 = vsel %vm69, %v70, %v68
    %v72 = vmax.f32 %v71, 1e-12
    %v73 = vmul.f32 %v58, %v58
    %74 = vadd.xlane.f32.xlu0 %v73
    %v75 = vpop.xlane.xlu0 %74
    %v76 = vrsqrt.pop %v75
    %v77 = vmul.f32 %v75, %v76
    %vm78 = vcmp.eq.f32.partialorder %v75, inf
    %v79 = vsel %vm78, %v75, %v77
    %vm80 = vcmp.eq.f32.partialorder %v75, 0.0
    %v81 = vand.u32 %v75, 2147483648
    %v82 = vsel %vm80, %v81, %v79
    %v83 = vmax.f32 %v82, 1e-12
    %v84 = vmul.f32 %v72, %v83
    %v85 = vrcp.pop %v84
    %v86 = vmul.f32 %v61, %v85
    %v87 = vmax.f32 %v86, -1.0
    %v88 = vmin.f32 %v87, 1.0
    %vm89 = vcmp.ge.f32.partialorder %v54, 0.0
    %v90 = vsel %vm89, %v55, 0.0
    %v91 = vsel %vm89, %v54, 0.0
    %v92 = vmul.f32 %v90, %v91
    %93 = vadd.xlane.f32.xlu0 %v92
    %v94 = vpop.xlane.xlu0 %93
    %v95 = vmul.f32 %v90, %v90
    %96 = vadd.xlane.f32.xlu0 %v95
    %v97 = vpop.xlane.xlu0 %96
    %v98 = vrsqrt.pop %v97
    %v99 = vmul.f32 %v97, %v98
    %vm100 = vcmp.eq.f32.partialorder %v97, inf
    %v101 = vsel %vm100, %v97, %v99
    %vm102 = vcmp.eq.f32.partialorder %v97, 0.0
    %v103 = vand.u32 %v97, 2147483648
    %v104 = vsel %vm102, %v103, %v101
    %v105 = vmax.f32 %v104, 1e-12
    %v106 = vmul.f32 %v91, %v91
    %107 = vadd.xlane.f32.xlu0 %v106
    %v108 = vpop.xlane.xlu0 %107
    %v109 = vrsqrt.pop %v108
    %v110 = vmul.f32 %v108, %v109
    %vm111 = vcmp.eq.f32.partialorder %v108, inf
    %v112 = vsel %vm111, %v108, %v110
    %vm113 = vcmp.eq.f32.partialorder %v108, 0.0
    %v114 = vand.u32 %v108, 2147483648
    %v115 = vsel %vm113, %v114, %v112
    %v116 = vmax.f32 %v115, 1e-12
    %v117 = vmul.f32 %v105, %v116
    %v118 = vrcp.pop %v117
    %v119 = vmul.f32 %v94, %v118
    %v120 = vmax.f32 %v119, -1.0
    %v121 = vmin.f32 %v120, 1.0
    %v122 = vand.u32 2147483647, %v53
    %123 = vadd.xlane.f32.xlu0 %v122
    %v124 = vpop.xlane.xlu0 %123
    %v125 = vand.u32 2147483647, %v55
    %126 = vadd.xlane.f32.xlu0 %v125
    %v127 = vpop.xlane.xlu0 %126
    %vm128 = vcmask 7168
    %v129 = vsel %vm128, %v88, %v121
    %vm130 = vcmask 15360
    %v131 = vsel %vm130, %v129, %v124
    %vm132 = vcmask 23552
    %v133 = vsel %vm132, %v131, %v127
    %vm134 = vcmask 31744
    %135 = vst.msk [vmem:[%s4] sm:$0xff] %vm134, %v133
    // Predicated region
    $region30: #{finetune_pair_sa_loss.1} parent=1 // pred_check
      _
    $region31: #{finetune_pair_sa_loss.1} parent=1 // pred_check_branch
      %137 = sbr.rel (0) target = $region33
    $region32: #{finetune_pair_sa_loss.1} parent=1 // pred_region
      _
    $region33: #{finetune_pair_sa_loss.1} parent=1 // pred_fallthru
      _
    // Predicated region
    $region34: #{finetune_pair_sa_loss.1} parent=1 // pred_check
      _
    $region35: #{finetune_pair_sa_loss.1} parent=1 // pred_check_branch
      %139 = sbr.rel (0) target = $region37
    $region36: #{finetune_pair_sa_loss.1} parent=1 // pred_region
      _
    $region37: #{finetune_pair_sa_loss.1} parent=1 // pred_fallthru
      _
    %140 = vsyncpa [#allocation3], 1
    %141 = vsyncpa [#allocation5], 1

</llo_original>
